<compile_context>
chip_gen: v5e
topology: v5e:2x2
jax: 0.10.0
libtpu: 0.0.40
codegen_flags: <defaults>
</compile_context>

<pallas_src>
import functools

import jax
import jax.numpy as jnp
from jax.experimental import pallas as pl
from jax.experimental.pallas import tpu as pltpu

_LANES = 128      # vreg lane width
_SUBLANES = 8     # vreg sublane depth (f32)
_TILE_ROWS = 512  # 512 x 128 x 4B = 256 KiB per block -> amortizes step overhead,
                  # tiny vs. every generation's scoped VMEM limit (even v7x).


def _loss_generator_kernel(inv_count, x_ref, out_ref, acc_ref):
    # x_ref:   (TILE_ROWS, 128) block in VMEM (auto-pipelined).
    # out_ref: (1, 1) scalar slot in SMEM (resident across the grid).
    # acc_ref: (8, 128) f32 VMEM scratch holding the running vreg-shaped sum.
    @pl.when(pl.program_id(0) == 0)
    def _init():
        acc_ref[...] = jnp.zeros_like(acc_ref)

    # Cast per block (keeps HBM traffic at the input dtype width, e.g. bf16).
    x = x_ref[...].astype(jnp.float32)
    logs = jnp.log(x)  # EUP; -inf / NaN propagate exactly like torch.log.
    # Fold the block into one vreg with pure VPU adds (no per-step XLU reduce).
    acc_ref[...] += logs.reshape(-1, _SUBLANES, _LANES).sum(axis=0)

    @pl.when(pl.program_id(0) == pl.num_programs(0) - 1)
    def _finalize():
        # Single cross-lane/sublane reduce + scale by 1/true_count.
        out_ref[0, 0] = jnp.sum(acc_ref[...]) * inv_count


def loss_generator_pallas(d_fake: jax.Array) -> jax.Array:
    """Pallas TPU implementation of torch.mean(torch.log(d_fake))."""
    n = d_fake.size
    assert n > 0, "mean over an empty tensor is undefined"

    flat = d_fake.reshape(-1)
    rows = pl.cdiv(n, _LANES)
    if rows <= _TILE_ROWS:
        # Single block: just round rows up to the sublane multiple.
        tile_rows = ((rows + _SUBLANES - 1) // _SUBLANES) * _SUBLANES
    else:
        tile_rows = _TILE_ROWS
    rows_padded = ((rows + tile_rows - 1) // tile_rows) * tile_rows

    pad = rows_padded * _LANES - n
    if pad:
        # Pad with 1.0: log(1) = 0 contributes nothing to the sum.
        flat = jnp.pad(flat, (0, pad), constant_values=1)
    x2d = flat.reshape(rows_padded, _LANES)

    num_blocks = rows_padded // tile_rows
    inv_count = 1.0 / float(n)  # divide by the TRUE element count

    out = pl.pallas_call(
        functools.partial(_loss_generator_kernel, inv_count),
        out_shape=jax.ShapeDtypeStruct((1, 1), jnp.float32),
        grid_spec=pltpu.PrefetchScalarGridSpec(
            num_scalar_prefetch=0,
            grid=(num_blocks,),
            in_specs=[pl.BlockSpec((tile_rows, _LANES), lambda i: (i, 0))],
            out_specs=pl.BlockSpec(memory_space=pltpu.SMEM),
            scratch_shapes=[pltpu.VMEM((_SUBLANES, _LANES), jnp.float32)],
        ),
        compiler_params=pltpu.CompilerParams(
            # Accumulator is carried across the grid axis -> "arbitrary".
            dimension_semantics=("arbitrary",),
            # Double-buffered 256 KiB blocks need far less than this; keep a
            # modest explicit limit that is safe on v5e/v6e/v7x alike.
            vmem_limit_bytes=16 * 1024 * 1024,
        ),
    )(x2d)
    return out.reshape(())  # 0-d scalar, matching torch.mean


def loss_generator(d_fake: jax.Array, *, min_pallas_elems: int = 16384) -> jax.Array:
    """Dispatching wrapper: tiny GAN batches are pure launch overhead for a
    custom kernel, so let XLA fuse them; large inputs take the Pallas path."""
    if d_fake.size < min_pallas_elems:
        return jnp.mean(jnp.log(d_fake.astype(jnp.float32)))
    return loss_generator_pallas(d_fake)
    # TODO(synk): on v7x, a leading size-2 "parallel" grid axis could split the
    # mem-bound reduction across both TensorCores for very large batches.


if __name__ == "__main__":
    key = jax.random.PRNGKey(0)
    k1, k2 = jax.random.split(key)

    # --- Case 1: spec-sized GAN batch (B=8, single block path) ---------------
    d_fake_small = jax.random.uniform(
        k1, (8, 1), dtype=jnp.float32, minval=1e-3, maxval=1.0
    )
    out_small = jax.block_until_ready(loss_generator_pallas(d_fake_small))
    ref_small = jnp.mean(jnp.log(d_fake_small))
    assert jnp.allclose(out_small, ref_small, rtol=1e-5, atol=1e-5), (
        out_small, ref_small)

    # --- Case 2: larger batch exercising multi-block grid + remainder pad ----
    d_fake_big = jax.random.uniform(
        k2, (70_000, 1), dtype=jnp.float32, minval=1e-3, maxval=1.0
    )
    out_big = jax.block_until_ready(loss_generator_pallas(d_fake_big))
    ref_big = jnp.mean(jnp.log(d_fake_big))
    assert jnp.allclose(out_big, ref_big, rtol=1e-5, atol=1e-5), (out_big, ref_big)

    # --- Case 3: bf16 discriminator output (per-block cast inside kernel) ----
    d_fake_bf16 = d_fake_big.astype(jnp.bfloat16)
    out_bf16 = jax.block_until_ready(loss_generator_pallas(d_fake_bf16))
    ref_bf16 = jnp.mean(jnp.log(d_fake_bf16.astype(jnp.float32)))
    assert jnp.allclose(out_bf16, ref_bf16, rtol=1e-5, atol=1e-5), (
        out_bf16, ref_bf16)

    # --- Dispatcher sanity (tiny batch falls back to fused XLA) --------------
    out_disp = jax.block_until_ready(loss_generator(d_fake_small))
    assert jnp.allclose(out_disp, ref_small, rtol=1e-5, atol=1e-5)

    print("KERNEL_OK")
</pallas_src>

<mosaic_0001>
module attributes {stable_mosaic.version = 11 : i64} {
  func.func @_loss_generator_kernel(%arg0: i32, %arg1: memref<8x128xf32, #tpu.memory_space<vmem>>, %arg2: memref<1x1xf32, #tpu.memory_space<smem>>, %arg3: memref<8x128xf32, #tpu.memory_space<vmem>>) attributes {dimension_semantics = [#tpu.dimension_semantics<arbitrary>], iteration_bounds = array<i64: 1>, scalar_prefetch = 0 : i64, scratch_operands = 1 : i64, tpu.core_type = #tpu.core_type<tc>, window_params = [{transform_indices = @transform_0, window_bounds = array<i64: 8, 128>}, {transform_indices = @transform_1, window_bounds = array<i64: 1, 1>}]} {
    %c0_i32 = arith.constant 0 : i32
    %0 = arith.cmpi eq, %arg0, %c0_i32 : i32
    %1 = arith.extui %0 : i1 to i32
    %c0_i32_0 = arith.constant 0 : i32
    %2 = arith.cmpi ne, %1, %c0_i32_0 : i32
    scf.if %2 {
      %cst_8 = arith.constant 0.000000e+00 : f32
      %13 = vector.broadcast %cst_8 : f32 to vector<8x128xf32>
      %c0_9 = arith.constant 0 : index
      %c0_10 = arith.constant 0 : index
      %14 = vector.load %arg3[%c0_9, %c0_10] : memref<8x128xf32, #tpu.memory_space<vmem>>, vector<8x128xf32>
      tpu.vector_store %arg3[%c0_9, %c0_10], %13 {strides = array<i32>} : memref<8x128xf32, #tpu.memory_space<vmem>>, vector<8x128xf32>,
    } else {
    }
    %c0 = arith.constant 0 : index
    %c0_1 = arith.constant 0 : index
    %3 = vector.load %arg1[%c0, %c0_1] : memref<8x128xf32, #tpu.memory_space<vmem>>, vector<8x128xf32>
    %4 = math.log %3 : vector<8x128xf32>
    %c0_2 = arith.constant 0 : index
    %c0_3 = arith.constant 0 : index
    %5 = vector.load %arg3[%c0_2, %c0_3] : memref<8x128xf32, #tpu.memory_space<vmem>>, vector<8x128xf32>
    %6 = vector.shape_cast %4 : vector<8x128xf32> to vector<1x8x128xf32>
    %cst = arith.constant dense<0.000000e+00> : vector<8x128xf32>
    %7 = vector.multi_reduction <add>, %6, %cst [0] : vector<1x8x128xf32> to vector<8x128xf32>
    %8 = arith.addf %5, %7 : vector<8x128xf32>
    %c0_4 = arith.constant 0 : index
    %c0_5 = arith.constant 0 : index
    %9 = vector.load %arg3[%c0_4, %c0_5] : memref<8x128xf32, #tpu.memory_space<vmem>>, vector<8x128xf32>
    tpu.vector_store %arg3[%c0_4, %c0_5], %8 {strides = array<i32>} : memref<8x128xf32, #tpu.memory_space<vmem>>, vector<8x128xf32>,
    %c0_i32_6 = arith.constant 0 : i32
    %10 = arith.cmpi eq, %arg0, %c0_i32_6 : i32
    %11 = arith.extui %10 : i1 to i32
    %c0_i32_7 = arith.constant 0 : i32
    %12 = arith.cmpi ne, %11, %c0_i32_7 : i32
    scf.if %12 {
      %c0_8 = arith.constant 0 : index
      %c0_9 = arith.constant 0 : index
      %13 = vector.load %arg3[%c0_8, %c0_9] : memref<8x128xf32, #tpu.memory_space<vmem>>, vector<8x128xf32>
      %14 = vector.shape_cast %13 : vector<8x128xf32> to vector<1x8x128xf32>
      %cst_10 = arith.constant dense<0.000000e+00> : vector<1xf32>
      %15 = vector.multi_reduction <add>, %14, %cst_10 [1, 2] : vector<1x8x128xf32> to vector<1xf32>
      %16 = vector.shape_cast %15 : vector<1xf32> to vector<1x1x1xf32>
      %17 = vector.extract %16[0, 0, 0] : f32 from vector<1x1x1xf32>
      %cst_11 = arith.constant 1.250000e-01 : f32
      %18 = arith.mulf %17, %cst_11 : f32
      %c0_12 = arith.constant 0 : index
      %c0_13 = arith.constant 0 : index
      %19 = memref.load %arg2[%c0_12, %c0_13] : memref<1x1xf32, #tpu.memory_space<smem>>
      memref.store %18, %arg2[%c0_12, %c0_13] : memref<1x1xf32, #tpu.memory_space<smem>>
    } else {
    }
    return
  }
  func.func @transform_0(%arg0: i32) -> (i32, i32) {
    %c0_i32 = arith.constant 0 : i32
    %c0_i32_0 = arith.constant 0 : i32
    return %arg0, %c0_i32 : i32, i32
  }
  func.func @transform_1(%arg0: i32) -> (i32, i32) {
    %c0_i32 = arith.constant 0 : i32
    %c0_i32_0 = arith.constant 0 : i32
    %c0_i32_1 = arith.constant 0 : i32
    return %c0_i32, %c0_i32_0 : i32, i32
  }
}

</mosaic_0001>

<llo_original>
// kernel: tpu_custom_call.1
$region0: #{tpu_custom_call.1}
  #allocation0 [shape = 'u32[]', space=smem, size = 0x4, offset = 0x4, fixed_abs, tag = 'smem constant byte address 0x4 - core index']
  #allocation1 [shape = 'u32[72,128]{1,0:T(1,128)}', space=vmem, size = 0x9000, scoped, tag = 'internal scratch']
  #allocation2 [shape = 'f32[8,128]{1,0:T(8,128)}', space=vmem, size = 0x1000, scoped, tag = 'scratch operand']
  %s0 = inlined_call_operand.hbm [shape: f32[8,128], index: 0, kind: input, shape index: {}]
  %s1 = inlined_call_operand.hbm [shape: f32[1,1], index: 1, kind: output, shape index: {}]
  %s2 = sld [smem:[#allocation0]]
  $region26: #{tpu_custom_call.1} parent=0
    _
  %s4 = ssub.s32 1, %s2
  %s5 = scalar_select 0, %s4, %s2
  $region1: #{tpu_custom_call.1} parent=0
    #allocation3 [shape = 'u8[4096]{0}', space=vmem, size = 0x1000, scoped, tag = 'input window, operand 0, single buffered']
    #allocation4 [shape = 's32[1]{0}', space=sflag, size = 0x4, scoped, tag = 'scoped memory for tpu_custom_call.1']
    #allocation5 [shape = 's32[1]{0}', space=sflag, size = 0x4, scoped, tag = 'scoped memory for tpu_custom_call.1']
    #allocation6 [shape = 'u8[512]{0}', space=smem, size = 0x200, scoped, tag = 'output window, operand 0, single buffered']
    %6 = vsyncpa [#allocation4], 0
    %7 = vsyncpa [#allocation5], 0
    // Predicated region
    $region2: #{tpu_custom_call.1} parent=1 // pred_check
      _
    $region3: #{tpu_custom_call.1} parent=1 // pred_check_branch
      %9 = sbr.rel (0) target = $region5
    $region4: #{tpu_custom_call.1} parent=1 // pred_region
      %11 = vsyncadd [#allocation4], 0
      %s13 = sshll.u32 %s0, 4
      %s14 = int_to_ptr.hbm [resolvable:$true] %s13
      %s15 = sshll.u32 [#allocation3], 4
      %s16 = int_to_ptr.vmem [resolvable:$true] %s15
      %18 = dma.hbm_to_vmem [thread:$0]  %s14, 128, %s16, [#allocation4]
    $region5: #{tpu_custom_call.1} parent=1 // pred_fallthru
      _
    // Predicated region
    $region6: #{tpu_custom_call.1} parent=1 // pred_check
      _
    $region7: #{tpu_custom_call.1} parent=1 // pred_check_branch
      %20 = sbr.rel (0) target = $region9
    $region8: #{tpu_custom_call.1} parent=1 // pred_region
      %22 = dma.done [#allocation4], 128
    $region9: #{tpu_custom_call.1} parent=1 // pred_fallthru
      _
    %p23 = scmp.eq.s32.totalorder 0, 0
    // Predicated region
    $region10: #{tpu_custom_call.1} parent=1 // pred_check
      %p24 = pneg %p23
    $region11: #{tpu_custom_call.1} parent=1 // pred_check_branch
      %26 = sbr.rel (%p24) target = $region13
    $region12: #{tpu_custom_call.1} parent=1 // pred_region
      %27 = vst [vmem:[#allocation2] sm:$0xff] 0.0
    $region13: #{tpu_custom_call.1} parent=1 // pred_fallthru
      _
    %v28 = vld [vmem:[#allocation3] sm:$0xff]
    %v29 = vlog2.pop %v28
    %v30 = vmul.f32 %v29, 0.6931472
    %v31 = vld [vmem:[#allocation2] sm:$0xff]
    %v32 = vadd.f32 %v30, 0.0
    %v33 = vadd.f32 %v31, %v32
    %34 = vst [vmem:[#allocation2] sm:$0xff] %v33
    // Predicated region
    $region14: #{tpu_custom_call.1} parent=1 // pred_check
      %p35 = pneg %p23
    $region15: #{tpu_custom_call.1} parent=1 // pred_check_branch
      %37 = sbr.rel (%p35) target = $region17
    $region16: #{tpu_custom_call.1} parent=1 // pred_region
      %v38 = vld [vmem:[#allocation2] sm:$0xff]
      %39 = vadd.xlane.f32.xlu0 %v38
      %v40 = vpop.xlane.xlu0 %39
      %v41 = vrot.slane %v40, 4
      %v42 = vadd.f32 %v40, %v41
      %v43 = vrot.slane %v42, 2
      %v44 = vadd.f32 %v42, %v43
      %v45 = vrot.slane %v44, 1
      %v46 = vadd.f32 %v44, %v45
      %s47 = vtos %v46
      %s48 = smul.f32 %s47, 0.125
      %s49 = scalar_lea.smem [#allocation6], 0
      %50 = sst [smem:[%s49]] %s48
    $region17: #{tpu_custom_call.1} parent=1 // pred_fallthru
      _
    // Predicated region
    $region18: #{tpu_custom_call.1} parent=1 // pred_check
      _
    $region19: #{tpu_custom_call.1} parent=1 // pred_check_branch
      %52 = sbr.rel (0) target = $region21
    $region20: #{tpu_custom_call.1} parent=1 // pred_region
      %54 = vsyncadd [#allocation5], 0
      %s56 = sshll.u32 %s1, 4
      %s57 = int_to_ptr.hbm [resolvable:$true] %s56
      %59 = dma.smem_to_hbm [#allocation6], 16, %s57, [#allocation5]
    $region21: #{tpu_custom_call.1} parent=1 // pred_fallthru
      _
    // Predicated region
    $region22: #{tpu_custom_call.1} parent=1 // pred_check
      _
    $region23: #{tpu_custom_call.1} parent=1 // pred_check_branch
      %61 = sbr.rel (0) target = $region25
    $region24: #{tpu_custom_call.1} parent=1 // pred_region
      %63 = dma.done [#allocation5], 16
    $region25: #{tpu_custom_call.1} parent=1 // pred_fallthru
      _
    %64 = sfence
    %65 = vsyncpa [#allocation4], 1
    %66 = vsyncpa [#allocation5], 1

</llo_original>
